<compile_context>
chip_gen: v5e
topology: v5e:2x2
jax: 0.10.0
libtpu: 0.0.40
codegen_flags: <defaults>
</compile_context>

<pallas_src>
import jax
import jax.numpy as jnp
from jax.experimental import pallas as pl
from jax.experimental.pallas import tpu as pltpu  # noqa: F401  (TPU backend)


def _svm_kernel(x_ref, w_ref, b_ref, o_ref):
    """logits = x @ W_kn + b in one MXU contraction (everything VMEM-resident).

    x_ref: (B, K) f32
    w_ref: (K, N) f32  -- nn.Linear weight pre-transposed once at init
    b_ref: (1, N) f32
    o_ref: (B, N) f32
    """
    logits = jnp.dot(
        x_ref[...], w_ref[...], preferred_element_type=jnp.float32
    )
    o_ref[...] = (logits + b_ref[...]).astype(o_ref.dtype)


def prepare_svm_params(weight, bias):
    """One-time parameter layout work (outside the per-call path).

    weight: (num_classes, K) float32 — nn.Linear.weight layout.
    bias:   (num_classes,)  float32.

    Returns (K, num_classes) weight and (1, num_classes) bias.
    """
    w_kn = jnp.asarray(weight).T               # (K, N): MXU-native contraction
    b_row = jnp.asarray(bias).reshape(1, -1)   # (1, N): broadcast add in-kernel
    return w_kn, b_row


@jax.jit
def svm_forward(x_nchw, w_kn, b_row):
    """Forward pass of the SVM module.

    Args:
      x_nchw: (B, 3, S, S) float32, NCHW like the PyTorch module.
      w_kn:   (K, num_classes) float32 — pre-transposed weight.
      b_row:  (1, num_classes) float32 — pre-reshaped bias.

    Returns:
      (B, num_classes) float32 logits.
    """
    B = x_nchw.shape[0]
    K, N = w_kn.shape

    # flatten(start_dim=1): row-major reshape, a free bitcast — no extra HBM op.
    x2d = x_nchw.reshape(B, K)

    # No grid: every operand is a full-array VMEM block, single MXU pass.
    # No CostEstimate: at ~30 KFLOP the call should look near-free to XLA.
    return pl.pallas_call(
        _svm_kernel,
        out_shape=jax.ShapeDtypeStruct((B, N), jnp.float32),
    )(x2d, w_kn, b_row)


def init_svm_params(key, num_classes, input_features):
    """Deterministic init mimicking nn.Linear defaults (uniform ±1/sqrt(fan_in))."""
    kw, kb = jax.random.split(key)
    bound = 1.0 / jnp.sqrt(jnp.float32(input_features))
    weight = jax.random.uniform(
        kw, (num_classes, input_features), jnp.float32, -bound, bound
    )
    bias = jax.random.uniform(kb, (num_classes,), jnp.float32, -bound, bound)
    return weight, bias


if __name__ == "__main__":
    # Small shapes consistent with the module: cfg.DATASET.SIZE = 16 → K = 3*16*16.
    B, C, S = 2, 3, 16
    NUM_CLASSES = 10
    K = C * S * S  # 768

    key = jax.random.PRNGKey(0)
    kx, kp = jax.random.split(key)

    x = jax.random.normal(kx, (B, C, S, S), jnp.float32)
    weight, bias = init_svm_params(kp, NUM_CLASSES, K)

    # One-time parameter layout work (amortized to init, not per forward).
    w_kn, b_row = prepare_svm_params(weight, bias)

    out = svm_forward(x, w_kn, b_row)
    jax.block_until_ready(out)

    # Sanity check against plain-JAX reference (flatten + nn.Linear semantics).
    ref = x.reshape(B, K) @ weight.T + bias
    assert out.shape == (B, NUM_CLASSES)
    assert jnp.allclose(out, ref, atol=1e-4, rtol=1e-4)

    print("KERNEL_OK")
</pallas_src>

<mosaic_0001>
module attributes {stable_mosaic.version = 11 : i64} {
  func.func @_svm_kernel(%arg0: memref<2x768xf32, #tpu.memory_space<vmem>>, %arg1: memref<768x10xf32, #tpu.memory_space<vmem>>, %arg2: memref<1x10xf32, #tpu.memory_space<vmem>>, %arg3: memref<2x10xf32, #tpu.memory_space<vmem>>) attributes {dimension_semantics = [], scalar_prefetch = 0 : i64, scratch_operands = 0 : i64, tpu.core_type = #tpu.core_type<tc>} {
    %c0 = arith.constant 0 : index
    %c0_0 = arith.constant 0 : index
    %0 = vector.load %arg0[%c0, %c0_0] : memref<2x768xf32, #tpu.memory_space<vmem>>, vector<2x768xf32>
    %c0_1 = arith.constant 0 : index
    %c0_2 = arith.constant 0 : index
    %1 = vector.load %arg1[%c0_1, %c0_2] : memref<768x10xf32, #tpu.memory_space<vmem>>, vector<768x10xf32>
    %cst = arith.constant dense<0.000000e+00> : vector<2x10xf32>
    %2 = tpu.matmul %0, %1, %cst {dimension_numbers = #tpu.dot_dimension_numbers<[1], [0], [0], [1], [0, 0, 1, 1], [], []>} : vector<2x768xf32>, vector<768x10xf32>, vector<2x10xf32> -> vector<2x10xf32>
    %c0_3 = arith.constant 0 : index
    %c0_4 = arith.constant 0 : index
    %3 = vector.load %arg2[%c0_3, %c0_4] : memref<1x10xf32, #tpu.memory_space<vmem>>, vector<1x10xf32>
    %4 = vector.broadcast %3 : vector<1x10xf32> to vector<2x10xf32>
    %5 = arith.addf %2, %4 : vector<2x10xf32>
    %c0_5 = arith.constant 0 : index
    %c0_6 = arith.constant 0 : index
    %6 = vector.load %arg3[%c0_5, %c0_6] : memref<2x10xf32, #tpu.memory_space<vmem>>, vector<2x10xf32>
    tpu.vector_store %arg3[%c0_5, %c0_6], %5 {strides = array<i32>} : memref<2x10xf32, #tpu.memory_space<vmem>>, vector<2x10xf32>,
    return
  }
}

</mosaic_0001>

<llo_original>
// kernel: svm_forward.1
$region0: #{svm_forward.1}
  #allocation0 [shape = 'u32[]', space=smem, size = 0x4, offset = 0x4, fixed_abs, tag = 'smem constant byte address 0x4 - core index']
  #allocation1 [shape = 'u32[72,128]{1,0:T(1,128)}', space=vmem, size = 0x9000, scoped, tag = 'internal scratch']
  %s0 = inlined_call_operand.vmem [shape: f32[2,768], index: 0, kind: input, shape index: {}]
  %s1 = inlined_call_operand.vmem [shape: f32[768,10], index: 1, kind: input, shape index: {}]
  %s2 = inlined_call_operand.vmem [shape: f32[1,10], index: 2, kind: input, shape index: {}]
  %s3 = inlined_call_operand.hbm [shape: f32[2,10], index: 3, kind: output, shape index: {}]
  %s4 = sld [smem:[#allocation0]]
  $region22: #{svm_forward.1} parent=0
    _
  %s6 = ssub.s32 1, %s4
  %s7 = scalar_select 0, %s6, %s4
  $region1: #{svm_forward.1} parent=0
    #allocation2 [shape = 'u8[1024]{0}', space=vmem, size = 0x400, scoped, tag = 'output window, operand 0, single buffered']
    #allocation3 [shape = 's32[1]{0}', space=sflag, size = 0x4, scoped, tag = 'scoped memory for svm_forward.1']
    %8 = vsyncpa [#allocation3], 0
    // Predicated region
    $region2: #{svm_forward.1} parent=1 // pred_check
      _
    $region3: #{svm_forward.1} parent=1 // pred_check_branch
      %10 = sbr.rel (0) target = $region5
    $region4: #{svm_forward.1} parent=1 // pred_region
      _
    $region5: #{svm_forward.1} parent=1 // pred_fallthru
      _
    // Predicated region
    $region6: #{svm_forward.1} parent=1 // pred_check
      _
    $region7: #{svm_forward.1} parent=1 // pred_check_branch
      %12 = sbr.rel (0) target = $region9
    $region8: #{svm_forward.1} parent=1 // pred_region
      _
    $region9: #{svm_forward.1} parent=1 // pred_fallthru
      _
    // Predicated region
    $region10: #{svm_forward.1} parent=1 // pred_check
      _
    $region11: #{svm_forward.1} parent=1 // pred_check_branch
      %14 = sbr.rel (0) target = $region13
    $region12: #{svm_forward.1} parent=1 // pred_region
      _
    $region13: #{svm_forward.1} parent=1 // pred_fallthru
      _
    %v15 = vld [vmem:[%s0] sm:$0xff]
    %v16 = vld [vmem:[%s0 + $0x8] sm:$0xf]
    %v17 = vld [vmem:[%s1] sm:$0xff]
    %v18 = vld [vmem:[%s1 + $0x8] sm:$0xff]
    %v19 = vld [vmem:[%s1 + $0x10] sm:$0xff]
    %v20 = vld [vmem:[%s1 + $0x18] sm:$0xff]
    %v21 = vld [vmem:[%s1 + $0x20] sm:$0xff]
    %v22 = vld [vmem:[%s1 + $0x28] sm:$0xff]
    %v23 = vld [vmem:[%s1 + $0x30] sm:$0xff]
    %v24 = vld [vmem:[%s1 + $0x38] sm:$0xff]
    %v25 = vld [vmem:[%s1 + $0x40] sm:$0xff]
    %v26 = vld [vmem:[%s1 + $0x48] sm:$0xff]
    %v27 = vld [vmem:[%s1 + $0x50] sm:$0xff]
    %v28 = vld [vmem:[%s1 + $0x58] sm:$0xff]
    %v29 = vld [vmem:[%s1 + $0x60] sm:$0xff]
    %v30 = vld [vmem:[%s1 + $0x68] sm:$0xff]
    %v31 = vld [vmem:[%s1 + $0x70] sm:$0xff]
    %v32 = vld [vmem:[%s1 + $0x78] sm:$0xff]
    %v33 = vld [vmem:[%s1 + $0x80] sm:$0xff]
    %v34 = vld [vmem:[%s1 + $0x88] sm:$0xff]
    %v35 = vld [vmem:[%s1 + $0x90] sm:$0xff]
    %v36 = vld [vmem:[%s1 + $0x98] sm:$0xff]
    %v37 = vld [vmem:[%s1 + $0xa0] sm:$0xff]
    %v38 = vld [vmem:[%s1 + $0xa8] sm:$0xff]
    %v39 = vld [vmem:[%s1 + $0xb0] sm:$0xff]
    %v40 = vld [vmem:[%s1 + $0xb8] sm:$0xff]
    %v41 = vld [vmem:[%s1 + $0xc0] sm:$0xff]
    %v42 = vld [vmem:[%s1 + $0xc8] sm:$0xff]
    %v43 = vld [vmem:[%s1 + $0xd0] sm:$0xff]
    %v44 = vld [vmem:[%s1 + $0xd8] sm:$0xff]
    %v45 = vld [vmem:[%s1 + $0xe0] sm:$0xff]
    %v46 = vld [vmem:[%s1 + $0xe8] sm:$0xff]
    %v47 = vld [vmem:[%s1 + $0xf0] sm:$0xff]
    %v48 = vld [vmem:[%s1 + $0xf8] sm:$0xff]
    %v49 = vld [vmem:[%s1 + $0x100] sm:$0xff]
    %v50 = vld [vmem:[%s1 + $0x108] sm:$0xff]
    %v51 = vld [vmem:[%s1 + $0x110] sm:$0xff]
    %v52 = vld [vmem:[%s1 + $0x118] sm:$0xff]
    %v53 = vld [vmem:[%s1 + $0x120] sm:$0xff]
    %v54 = vld [vmem:[%s1 + $0x128] sm:$0xff]
    %v55 = vld [vmem:[%s1 + $0x130] sm:$0xff]
    %v56 = vld [vmem:[%s1 + $0x138] sm:$0xff]
    %v57 = vld [vmem:[%s1 + $0x140] sm:$0xff]
    %v58 = vld [vmem:[%s1 + $0x148] sm:$0xff]
    %v59 = vld [vmem:[%s1 + $0x150] sm:$0xff]
    %v60 = vld [vmem:[%s1 + $0x158] sm:$0xff]
    %v61 = vld [vmem:[%s1 + $0x160] sm:$0xff]
    %v62 = vld [vmem:[%s1 + $0x168] sm:$0xff]
    %v63 = vld [vmem:[%s1 + $0x170] sm:$0xff]
    %v64 = vld [vmem:[%s1 + $0x178] sm:$0xff]
    %v65 = vld [vmem:[%s1 + $0x180] sm:$0xff]
    %v66 = vld [vmem:[%s1 + $0x188] sm:$0xff]
    %v67 = vld [vmem:[%s1 + $0x190] sm:$0xff]
    %v68 = vld [vmem:[%s1 + $0x198] sm:$0xff]
    %v69 = vld [vmem:[%s1 + $0x1a0] sm:$0xff]
    %v70 = vld [vmem:[%s1 + $0x1a8] sm:$0xff]
    %v71 = vld [vmem:[%s1 + $0x1b0] sm:$0xff]
    %v72 = vld [vmem:[%s1 + $0x1b8] sm:$0xff]
    %v73 = vld [vmem:[%s1 + $0x1c0] sm:$0xff]
    %v74 = vld [vmem:[%s1 + $0x1c8] sm:$0xff]
    %v75 = vld [vmem:[%s1 + $0x1d0] sm:$0xff]
    %v76 = vld [vmem:[%s1 + $0x1d8] sm:$0xff]
    %v77 = vld [vmem:[%s1 + $0x1e0] sm:$0xff]
    %v78 = vld [vmem:[%s1 + $0x1e8] sm:$0xff]
    %v79 = vld [vmem:[%s1 + $0x1f0] sm:$0xff]
    %v80 = vld [vmem:[%s1 + $0x1f8] sm:$0xff]
    %v81 = vld [vmem:[%s1 + $0x200] sm:$0xff]
    %v82 = vld [vmem:[%s1 + $0x208] sm:$0xff]
    %v83 = vld [vmem:[%s1 + $0x210] sm:$0xff]
    %v84 = vld [vmem:[%s1 + $0x218] sm:$0xff]
    %v85 = vld [vmem:[%s1 + $0x220] sm:$0xff]
    %v86 = vld [vmem:[%s1 + $0x228] sm:$0xff]
    %v87 = vld [vmem:[%s1 + $0x230] sm:$0xff]
    %v88 = vld [vmem:[%s1 + $0x238] sm:$0xff]
    %v89 = vld [vmem:[%s1 + $0x240] sm:$0xff]
    %v90 = vld [vmem:[%s1 + $0x248] sm:$0xff]
    %v91 = vld [vmem:[%s1 + $0x250] sm:$0xff]
    %v92 = vld [vmem:[%s1 + $0x258] sm:$0xff]
    %v93 = vld [vmem:[%s1 + $0x260] sm:$0xff]
    %v94 = vld [vmem:[%s1 + $0x268] sm:$0xff]
    %v95 = vld [vmem:[%s1 + $0x270] sm:$0xff]
    %v96 = vld [vmem:[%s1 + $0x278] sm:$0xff]
    %v97 = vld [vmem:[%s1 + $0x280] sm:$0xff]
    %v98 = vld [vmem:[%s1 + $0x288] sm:$0xff]
    %v99 = vld [vmem:[%s1 + $0x290] sm:$0xff]
    %v100 = vld [vmem:[%s1 + $0x298] sm:$0xff]
    %v101 = vld [vmem:[%s1 + $0x2a0] sm:$0xff]
    %v102 = vld [vmem:[%s1 + $0x2a8] sm:$0xff]
    %v103 = vld [vmem:[%s1 + $0x2b0] sm:$0xff]
    %v104 = vld [vmem:[%s1 + $0x2b8] sm:$0xff]
    %v105 = vld [vmem:[%s1 + $0x2c0] sm:$0xff]
    %v106 = vld [vmem:[%s1 + $0x2c8] sm:$0xff]
    %v107 = vld [vmem:[%s1 + $0x2d0] sm:$0xff]
    %v108 = vld [vmem:[%s1 + $0x2d8] sm:$0xff]
    %v109 = vld [vmem:[%s1 + $0x2e0] sm:$0xff]
    %v110 = vld [vmem:[%s1 + $0x2e8] sm:$0xff]
    %v111 = vld [vmem:[%s1 + $0x2f0] sm:$0xff]
    %v112 = vld [vmem:[%s1 + $0x2f8] sm:$0xff]
    %v113 = vld [vmem:[%s2] sm:$0x1]
    %v115 = vperm.slane %v113, 0
    %119 = vst [vmem:[#allocation1] ss:$4 sm:$0xff] %v15
    %s120 = scalar_lea.vmem [#allocation1], 32
    %121 = vst [vmem:[%s120] ss:$4 sm:$0xff] %v16
    %v122 = vld.sshfl [vmem:[#allocation1] sm:$0xff pattern:$0x73625140]
    %v123 = vld.sshfl [vmem:[#allocation1 + $0x8] sm:$0xff pattern:$0x73625140]
    %v124 = vld.sshfl [vmem:[#allocation1 + $0x10] sm:$0xff pattern:$0x73625140]
    %v125 = vld.sshfl [vmem:[#allocation1 + $0x18] sm:$0xff pattern:$0x73625140]
    %v126 = vld.sshfl [vmem:[#allocation1 + $0x20] sm:$0xff pattern:$0x73625140]
    %v127 = vld.sshfl [vmem:[#allocation1 + $0x28] sm:$0xff pattern:$0x73625140]
    %134 = vmatpush.msra.mxu0 %v32
    %135 = vmatpush.msra.mxu0 %v31
    %136 = vmatpush.msra.mxu0 %v30
    %137 = vmatpush.msra.mxu0 %v29
    %138 = vmatpush.msra.mxu0 %v28
    %139 = vmatpush.msra.mxu0 %v27
    %140 = vmatpush.msra.mxu0 %v26
    %141 = vmatpush.msra.mxu0 %v25
    %142 = vmatpush.msra.mxu0 %v24
    %143 = vmatpush.msra.mxu0 %v23
    %144 = vmatpush.msra.mxu0 %v22
    %145 = vmatpush.msra.mxu0 %v21
    %146 = vmatpush.msra.mxu0 %v20
    %147 = vmatpush.msra.mxu0 %v19
    %148 = vmatpush.msra.mxu0 %v18
    %149 = vmatpush.msra.mxu0 %v17
    %150 = vmatmul.f32.gmra.mxu0 %v122
    %v151 = vpop.f32.mrf.mxu0
    %v152 = vadd.f32 %v115, %v151
    %153 = vdwg.mxu0
    %154 = vmatpush.msra.mxu0 %v48
    %155 = vmatpush.msra.mxu0 %v47
    %156 = vmatpush.msra.mxu0 %v46
    %157 = vmatpush.msra.mxu0 %v45
    %158 = vmatpush.msra.mxu0 %v44
    %159 = vmatpush.msra.mxu0 %v43
    %160 = vmatpush.msra.mxu0 %v42
    %161 = vmatpush.msra.mxu0 %v41
    %162 = vmatpush.msra.mxu0 %v40
    %163 = vmatpush.msra.mxu0 %v39
    %164 = vmatpush.msra.mxu0 %v38
    %165 = vmatpush.msra.mxu0 %v37
    %166 = vmatpush.msra.mxu0 %v36
    %167 = vmatpush.msra.mxu0 %v35
    %168 = vmatpush.msra.mxu0 %v34
    %169 = vmatpush.msra.mxu0 %v33
    %170 = vmatmul.f32.gmra.mxu0 %v123
    %v171 = vpop.f32.mrf.mxu0
    %v172 = vadd.f32 %v152, %v171
    %173 = vdwg.mxu0
    %174 = vmatpush.msra.mxu0 %v64
    %175 = vmatpush.msra.mxu0 %v63
    %176 = vmatpush.msra.mxu0 %v62
    %177 = vmatpush.msra.mxu0 %v61
    %178 = vmatpush.msra.mxu0 %v60
    %179 = vmatpush.msra.mxu0 %v59
    %180 = vmatpush.msra.mxu0 %v58
    %181 = vmatpush.msra.mxu0 %v57
    %182 = vmatpush.msra.mxu0 %v56
    %183 = vmatpush.msra.mxu0 %v55
    %184 = vmatpush.msra.mxu0 %v54
    %185 = vmatpush.msra.mxu0 %v53
    %186 = vmatpush.msra.mxu0 %v52
    %187 = vmatpush.msra.mxu0 %v51
    %188 = vmatpush.msra.mxu0 %v50
    %189 = vmatpush.msra.mxu0 %v49
    %190 = vmatmul.f32.gmra.mxu0 %v124
    %v191 = vpop.f32.mrf.mxu0
    %v192 = vadd.f32 %v172, %v191
    %193 = vdwg.mxu0
    %194 = vmatpush.msra.mxu0 %v80
    %195 = vmatpush.msra.mxu0 %v79
    %196 = vmatpush.msra.mxu0 %v78
    %197 = vmatpush.msra.mxu0 %v77
    %198 = vmatpush.msra.mxu0 %v76
    %199 = vmatpush.msra.mxu0 %v75
    %200 = vmatpush.msra.mxu0 %v74
    %201 = vmatpush.msra.mxu0 %v73
    %202 = vmatpush.msra.mxu0 %v72
    %203 = vmatpush.msra.mxu0 %v71
    %204 = vmatpush.msra.mxu0 %v70
    %205 = vmatpush.msra.mxu0 %v69
    %206 = vmatpush.msra.mxu0 %v68
    %207 = vmatpush.msra.mxu0 %v67
    %208 = vmatpush.msra.mxu0 %v66
    %209 = vmatpush.msra.mxu0 %v65
    %210 = vmatmul.f32.gmra.mxu0 %v125
    %v211 = vpop.f32.mrf.mxu0
    %v212 = vadd.f32 %v192, %v211
    %213 = vdwg.mxu0
    %214 = vmatpush.msra.mxu0 %v96
    %215 = vmatpush.msra.mxu0 %v95
    %216 = vmatpush.msra.mxu0 %v94
    %217 = vmatpush.msra.mxu0 %v93
    %218 = vmatpush.msra.mxu0 %v92
    %219 = vmatpush.msra.mxu0 %v91
    %220 = vmatpush.msra.mxu0 %v90
    %221 = vmatpush.msra.mxu0 %v89
    %222 = vmatpush.msra.mxu0 %v88
    %223 = vmatpush.msra.mxu0 %v87
    %224 = vmatpush.msra.mxu0 %v86
    %225 = vmatpush.msra.mxu0 %v85
    %226 = vmatpush.msra.mxu0 %v84
    %227 = vmatpush.msra.mxu0 %v83
    %228 = vmatpush.msra.mxu0 %v82
    %229 = vmatpush.msra.mxu0 %v81
    %230 = vmatmul.f32.gmra.mxu0 %v126
    %v231 = vpop.f32.mrf.mxu0
    %v232 = vadd.f32 %v212, %v231
    %233 = vdwg.mxu0
    %234 = vmatpush.msra.mxu0 %v112
    %235 = vmatpush.msra.mxu0 %v111
    %236 = vmatpush.msra.mxu0 %v110
    %237 = vmatpush.msra.mxu0 %v109
    %238 = vmatpush.msra.mxu0 %v108
    %239 = vmatpush.msra.mxu0 %v107
    %240 = vmatpush.msra.mxu0 %v106
    %241 = vmatpush.msra.mxu0 %v105
    %242 = vmatpush.msra.mxu0 %v104
    %243 = vmatpush.msra.mxu0 %v103
    %244 = vmatpush.msra.mxu0 %v102
    %245 = vmatpush.msra.mxu0 %v101
    %246 = vmatpush.msra.mxu0 %v100
    %247 = vmatpush.msra.mxu0 %v99
    %248 = vmatpush.msra.mxu0 %v98
    %249 = vmatpush.msra.mxu0 %v97
    %250 = vmatmul.f32.gmra.mxu0 %v127
    %v251 = vpop.f32.mrf.mxu0
    %v252 = vadd.f32 %v232, %v251
    %253 = vdwg.mxu0
    %vm254 = vcmask 74752
    %255 = vst.msk [vmem:[#allocation2] sm:$0x3] %vm254, %v252
    // Predicated region
    $region14: #{svm_forward.1} parent=1 // pred_check
      _
    $region15: #{svm_forward.1} parent=1 // pred_check_branch
      %257 = sbr.rel (0) target = $region17
    $region16: #{svm_forward.1} parent=1 // pred_region
      %259 = vsyncadd [#allocation3], 0
      %s261 = sshll.u32 [#allocation2], 4
      %s262 = int_to_ptr.vmem [resolvable:$true] %s261
      %s263 = sshll.u32 %s3, 4
      %s264 = int_to_ptr.hbm [resolvable:$true] %s263
      %266 = dma.vmem_to_hbm [thread:$0]  %s262, 32, %s264, [#allocation3]
    $region17: #{svm_forward.1} parent=1 // pred_fallthru
      _
    // Predicated region
    $region18: #{svm_forward.1} parent=1 // pred_check
      _
    $region19: #{svm_forward.1} parent=1 // pred_check_branch
      %268 = sbr.rel (0) target = $region21
    $region20: #{svm_forward.1} parent=1 // pred_region
      %270 = dma.done [#allocation3], 32
    $region21: #{svm_forward.1} parent=1 // pred_fallthru
      _
    %271 = vsyncpa [#allocation3], 1

</llo_original>
